<compile_context>
chip_gen: v6e
topology: v6e:2x2x1
jax: 0.10.0
libtpu: 0.0.40
codegen_flags: <defaults>
</compile_context>

<pallas_src>
import functools

import jax
import jax.numpy as jnp
import numpy as np
from numpy.fft import fftshift
from jax.experimental import pallas as pl
from jax.experimental.pallas import tpu as pltpu


def _cmul_kernel(pr_ref, pi_ref, or_ref, oi_ref, outr_ref, outi_ref):
    a = pr_ref[...]          # (tk, C, tn) probe real
    b = pi_ref[...]          # (tk, C, tn) probe imag
    c = or_ref[...]          # (tk, 1, tn) object real (broadcast over C)
    d = oi_ref[...]          # (tk, 1, tn) object imag
    outr_ref[...] = a * c - b * d
    outi_ref[...] = a * d + b * c


def _largest_divisor(n, cap):
    """Largest d <= cap with n % d == 0 (n is small, e.g. batch size)."""
    cap = int(max(1, min(cap, n)))
    for d in range(cap, 0, -1):
        if n % d == 0:
            return d
    return 1


def _largest_aligned_divisor(n, cap, align):
    """Largest d <= cap with d % align == 0 and n % d == 0; fallback: n."""
    cap = int(max(1, min(cap, n)))
    d = (cap // align) * align
    while d >= align:
        if n % d == 0:
            return d
        d -= align
    return n  # no aligned divisor fits the cap -> use the full extent


def _choose_tiles(K, C, N, itemsize, budget_bytes):
    """Pick (tk, tn) so all double-buffered pipeline buffers fit the budget.

    VMEM cost per (k row, lane element): 4 probe-sized buffers (pr, pi, out_r,
    out_i) with the probe-mode axis sublane-padded to 8, plus 2 object-sized
    buffers (sublane-padded 1 -> 8), all double-buffered.
    """
    c_pad = ((C + 7) // 8) * 8
    per_k_per_lane = 2 * itemsize * (4 * c_pad + 2 * 8)
    max_lane = max(budget_bytes // per_k_per_lane, 128)
    tn = N if N <= max_lane else _largest_aligned_divisor(N, max_lane, 128)
    tk = _largest_divisor(K, max(budget_bytes // (per_k_per_lane * tn), 1))
    return tk, tn


def cmul_planes_pallas(pr, pi, o_r, o_i, *, vmem_budget_bytes=12 * 1024 * 1024):
    """Complex element-wise product on split real/imag planes (no extra copies).

    pr, pi:   (K, C, N) float32  probe planes, N = flattened spatial (H*W)
    o_r, o_i: (K, 1, N) float32  object planes, broadcast over probe modes C
    returns (out_r, out_i), each (K, C, N) float32
    """
    K, C, N = pr.shape
    tk, tn = _choose_tiles(K, C, N, pr.dtype.itemsize, vmem_budget_bytes)
    grid = (K // tk, pl.cdiv(N, tn))  # tk | K and tn | N (or tn == N)

    # Probe / output blocks cover the full probe-mode axis (second-to-last dim
    # equals the array extent, last dim is 128-aligned or full -> legal tiles).
    p_spec = pl.BlockSpec((tk, C, tn), lambda i, j: (i, 0, j))
    # Object block ignores the probe-mode axis: same O block reused for all C.
    o_spec = pl.BlockSpec((tk, 1, tn), lambda i, j: (i, 0, j))

    out_r, out_i = pl.pallas_call(
        _cmul_kernel,
        out_shape=(
            jax.ShapeDtypeStruct((K, C, N), pr.dtype),
            jax.ShapeDtypeStruct((K, C, N), pr.dtype),
        ),
        grid_spec=pltpu.PrefetchScalarGridSpec(
            num_scalar_prefetch=0,
            grid=grid,
            in_specs=[p_spec, p_spec, o_spec, o_spec],
            out_specs=(p_spec, p_spec),
        ),
        compiler_params=pltpu.CompilerParams(
            dimension_semantics=("parallel", "parallel"),
            # 32 MiB is safe on v5e/v6e (128 MiB physical) and v7x (64 MiB);
            # on v5e/v6e the budget + limit can be raised further if desired.
            vmem_limit_bytes=32 * 1024 * 1024,
        ),
    )(pr, pi, o_r, o_i)
    return out_r, out_i


@functools.partial(jax.jit, static_argnames=("vmem_budget_bytes",))
def cmul_pallas(P, O, *, vmem_budget_bytes=12 * 1024 * 1024):
    """CMul.forward (no-subpixel path): complex element-wise product.

    P: (K, C, H, W, 2) float32, last axis = (real, imag)
    O: (K, 1, H, W, 2) float32, broadcast over probe-mode axis C
    returns I: (K, C, H, W, 2) float32
    """
    K, C, H, W, _ = P.shape
    N = H * W
    # De-interleave to split-complex planes (one extra HBM pass; callers that
    # already keep real/imag planes separate should call cmul_planes_pallas
    # directly and skip both conversion passes).
    pr = P[..., 0].reshape(K, C, N)
    pi = P[..., 1].reshape(K, C, N)
    o_r = O[..., 0].reshape(K, 1, N)
    o_i = O[..., 1].reshape(K, 1, N)

    out_r, out_i = cmul_planes_pallas(
        pr, pi, o_r, o_i, vmem_budget_bytes=vmem_budget_bytes)

    return jnp.stack([out_r, out_i], axis=-1).reshape(K, C, H, W, 2)


class CMulPallas:
    """Mirror of skpr CMul; forward ignores dpos_proxy/gradient_ramp/beta."""

    def __init__(self, gradient_ramp, beta, epoch,
                 subpixel_optimization_active=lambda epoch: False):
        self.subpixel_optimization_active = subpixel_optimization_active
        self.epoch = epoch
        self.gradient_ramp = gradient_ramp
        self.beta = beta

    def forward(self, P, O, dpos_proxy):
        # Both branches have identical forward values; only backward differs.
        return cmul_pallas(P, O)


if __name__ == "__main__":
    K, C, H, W = 2, 4, 16, 16  # batch (scan positions), probe modes, spatial

    key = jax.random.PRNGKey(0)
    kp, ko, kd = jax.random.split(key, 3)
    P = jax.random.normal(kp, (K, C, H, W, 2), dtype=jnp.float32)
    O = jax.random.normal(ko, (K, 1, H, W, 2), dtype=jnp.float32)
    dpos_proxy = jax.random.normal(kd, (K, 2), dtype=jnp.float32)

    # deterministic "gradient ramp" as in skpr __init__ usage (unused in fwd)
    fy = fftshift(np.fft.fftfreq(H)).astype(np.float32)
    fx = fftshift(np.fft.fftfreq(W)).astype(np.float32)
    gradient_ramp = jnp.asarray(np.stack(np.meshgrid(fy, fx, indexing="ij")))
    beta = 0.9
    epoch = [0]

    mod = CMulPallas(gradient_ramp, beta, epoch)
    I = jax.block_until_ready(mod.forward(P, O, dpos_proxy))

    # reference check in plain JAX
    Pc = P[..., 0] + 1j * P[..., 1]
    Oc = O[..., 0] + 1j * O[..., 1]
    ref = Pc * Oc
    ref_ri = jnp.stack([ref.real, ref.imag], axis=-1)
    assert I.shape == (K, C, H, W, 2)
    np.testing.assert_allclose(np.asarray(I), np.asarray(ref_ri),
                               rtol=1e-5, atol=1e-5)

    # Also exercise a multi-block grid (tiny budget forces tk=1, tn=128 ->
    # grid (2, 2)) so the index_map broadcast of O over probe modes is covered.
    I2 = jax.block_until_ready(cmul_pallas(P, O, vmem_budget_bytes=64 * 1024))
    np.testing.assert_allclose(np.asarray(I2), np.asarray(ref_ri),
                               rtol=1e-5, atol=1e-5)

    print("KERNEL_OK")
</pallas_src>

<mosaic_0001>
module attributes {stable_mosaic.version = 11 : i64} {
  func.func @_cmul_kernel(%arg0: i32, %arg1: i32, %arg2: memref<2x4x256xf32, #tpu.memory_space<vmem>>, %arg3: memref<2x4x256xf32, #tpu.memory_space<vmem>>, %arg4: memref<2x1x256xf32, #tpu.memory_space<vmem>>, %arg5: memref<2x1x256xf32, #tpu.memory_space<vmem>>, %arg6: memref<2x4x256xf32, #tpu.memory_space<vmem>>, %arg7: memref<2x4x256xf32, #tpu.memory_space<vmem>>) attributes {dimension_semantics = [#tpu.dimension_semantics<parallel>, #tpu.dimension_semantics<parallel>], iteration_bounds = array<i64: 1, 1>, scalar_prefetch = 0 : i64, scratch_operands = 0 : i64, tpu.core_type = #tpu.core_type<tc>, window_params = [{transform_indices = @transform_0, window_bounds = array<i64: 2, 4, 256>}, {transform_indices = @transform_1, window_bounds = array<i64: 2, 4, 256>}, {transform_indices = @transform_2, window_bounds = array<i64: 2, 1, 256>}, {transform_indices = @transform_3, window_bounds = array<i64: 2, 1, 256>}, {transform_indices = @transform_4, window_bounds = array<i64: 2, 4, 256>}, {transform_indices = @transform_5, window_bounds = array<i64: 2, 4, 256>}]} {
    %c0 = arith.constant 0 : index
    %c0_0 = arith.constant 0 : index
    %c0_1 = arith.constant 0 : index
    %0 = vector.load %arg2[%c0, %c0_0, %c0_1] : memref<2x4x256xf32, #tpu.memory_space<vmem>>, vector<2x4x256xf32>
    %c0_2 = arith.constant 0 : index
    %c0_3 = arith.constant 0 : index
    %c0_4 = arith.constant 0 : index
    %1 = vector.load %arg3[%c0_2, %c0_3, %c0_4] : memref<2x4x256xf32, #tpu.memory_space<vmem>>, vector<2x4x256xf32>
    %c0_5 = arith.constant 0 : index
    %c0_6 = arith.constant 0 : index
    %c0_7 = arith.constant 0 : index
    %2 = vector.load %arg4[%c0_5, %c0_6, %c0_7] : memref<2x1x256xf32, #tpu.memory_space<vmem>>, vector<2x1x256xf32>
    %c0_8 = arith.constant 0 : index
    %c0_9 = arith.constant 0 : index
    %c0_10 = arith.constant 0 : index
    %3 = vector.load %arg5[%c0_8, %c0_9, %c0_10] : memref<2x1x256xf32, #tpu.memory_space<vmem>>, vector<2x1x256xf32>
    %4 = vector.broadcast %2 : vector<2x1x256xf32> to vector<2x4x256xf32>
    %5 = arith.mulf %0, %4 : vector<2x4x256xf32>
    %6 = vector.broadcast %3 : vector<2x1x256xf32> to vector<2x4x256xf32>
    %7 = arith.mulf %1, %6 : vector<2x4x256xf32>
    %8 = arith.subf %5, %7 : vector<2x4x256xf32>
    %c0_11 = arith.constant 0 : index
    %c0_12 = arith.constant 0 : index
    %c0_13 = arith.constant 0 : index
    %9 = vector.load %arg6[%c0_11, %c0_12, %c0_13] : memref<2x4x256xf32, #tpu.memory_space<vmem>>, vector<2x4x256xf32>
    tpu.vector_store %arg6[%c0_11, %c0_12, %c0_13], %8 {strides = array<i32>} : memref<2x4x256xf32, #tpu.memory_space<vmem>>, vector<2x4x256xf32>,
    %10 = vector.broadcast %3 : vector<2x1x256xf32> to vector<2x4x256xf32>
    %11 = arith.mulf %0, %10 : vector<2x4x256xf32>
    %12 = vector.broadcast %2 : vector<2x1x256xf32> to vector<2x4x256xf32>
    %13 = arith.mulf %1, %12 : vector<2x4x256xf32>
    %14 = arith.addf %11, %13 : vector<2x4x256xf32>
    %c0_14 = arith.constant 0 : index
    %c0_15 = arith.constant 0 : index
    %c0_16 = arith.constant 0 : index
    %15 = vector.load %arg7[%c0_14, %c0_15, %c0_16] : memref<2x4x256xf32, #tpu.memory_space<vmem>>, vector<2x4x256xf32>
    tpu.vector_store %arg7[%c0_14, %c0_15, %c0_16], %14 {strides = array<i32>} : memref<2x4x256xf32, #tpu.memory_space<vmem>>, vector<2x4x256xf32>,
    return
  }
  func.func @transform_0(%arg0: i32, %arg1: i32) -> (i32, i32, i32) {
    %c0_i32 = arith.constant 0 : i32
    %c0_i32_0 = arith.constant 0 : i32
    return %arg0, %c0_i32, %arg1 : i32, i32, i32
  }
  func.func @transform_1(%arg0: i32, %arg1: i32) -> (i32, i32, i32) {
    %c0_i32 = arith.constant 0 : i32
    %c0_i32_0 = arith.constant 0 : i32
    return %arg0, %c0_i32, %arg1 : i32, i32, i32
  }
  func.func @transform_2(%arg0: i32, %arg1: i32) -> (i32, i32, i32) {
    %c0_i32 = arith.constant 0 : i32
    %c0_i32_0 = arith.constant 0 : i32
    return %arg0, %c0_i32, %arg1 : i32, i32, i32
  }
  func.func @transform_3(%arg0: i32, %arg1: i32) -> (i32, i32, i32) {
    %c0_i32 = arith.constant 0 : i32
    %c0_i32_0 = arith.constant 0 : i32
    return %arg0, %c0_i32, %arg1 : i32, i32, i32
  }
  func.func @transform_4(%arg0: i32, %arg1: i32) -> (i32, i32, i32) {
    %c0_i32 = arith.constant 0 : i32
    %c0_i32_0 = arith.constant 0 : i32
    return %arg0, %c0_i32, %arg1 : i32, i32, i32
  }
  func.func @transform_5(%arg0: i32, %arg1: i32) -> (i32, i32, i32) {
    %c0_i32 = arith.constant 0 : i32
    %c0_i32_0 = arith.constant 0 : i32
    return %arg0, %c0_i32, %arg1 : i32, i32, i32
  }
}

</mosaic_0001>

<llo_original>
// kernel: squeeze.1
$region0: #{squeeze.1}
  %s0 = inlined_call_operand.vmem [shape: f32[2,16,16], index: 0, kind: input, shape index: {}]
  %s1 = inlined_call_operand.vmem [shape: f32[2,1,256], index: 1, kind: output, shape index: {}]
  $region1: #{squeeze.1} parent=0
    #allocation0 [shape = 'u8[16384]{0}', space=vmem, size = 0x4000, scoped, tag = 'scoped mem for output reshape']
    %v2 = vld [vmem:[%s0] ss:$8 sm:$0xf]
    %vm3 = vcmask 130048
    %4 = vst.msk [vmem:[#allocation0] ss:$8 sm:$0xf] %vm3, %v2
    %s5 = scalar_lea.vmem %s0, 7
    %v6 = vld [vmem:[%s5] ss:$8 sm:$0xf]
    %7 = vrot.lane.b32.xlu0 %v6, 112
    %v8 = vpop.permute.xlu0 %7
    %vm9 = vcmask 1048448
    %10 = vst.msk [vmem:[#allocation0] ss:$8 sm:$0xf] %vm9, %v8
    %s11 = scalar_lea.vmem %s0, 6
    %v12 = vld [vmem:[%s11] ss:$8 sm:$0xf]
    %13 = vrot.lane.b32.xlu0 %v12, 96
    %v14 = vpop.permute.xlu0 %13
    %vm15 = vcmask 917248
    %16 = vst.msk [vmem:[#allocation0] ss:$8 sm:$0xf] %vm15, %v14
    %s17 = scalar_lea.vmem %s0, 5
    %v18 = vld [vmem:[%s17] ss:$8 sm:$0xf]
    %19 = vrot.lane.b32.xlu0 %v18, 80
    %v20 = vpop.permute.xlu0 %19
    %vm21 = vcmask 786048
    %22 = vst.msk [vmem:[#allocation0] ss:$8 sm:$0xf] %vm21, %v20
    %s23 = scalar_lea.vmem %s0, 4
    %v24 = vld [vmem:[%s23] ss:$8 sm:$0xf]
    %25 = vrot.lane.b32.xlu0 %v24, 64
    %v26 = vpop.permute.xlu0 %25
    %vm27 = vcmask 654848
    %28 = vst.msk [vmem:[#allocation0] ss:$8 sm:$0xf] %vm27, %v26
    %s29 = scalar_lea.vmem %s0, 3
    %v30 = vld [vmem:[%s29] ss:$8 sm:$0xf]
    %31 = vrot.lane.b32.xlu0 %v30, 48
    %v32 = vpop.permute.xlu0 %31
    %vm33 = vcmask 523648
    %34 = vst.msk [vmem:[#allocation0] ss:$8 sm:$0xf] %vm33, %v32
    %s35 = scalar_lea.vmem %s0, 2
    %v36 = vld [vmem:[%s35] ss:$8 sm:$0xf]
    %37 = vrot.lane.b32.xlu0 %v36, 32
    %v38 = vpop.permute.xlu0 %37
    %vm39 = vcmask 392448
    %40 = vst.msk [vmem:[#allocation0] ss:$8 sm:$0xf] %vm39, %v38
    %s41 = scalar_lea.vmem %s0, 1
    %v42 = vld [vmem:[%s41] ss:$8 sm:$0xf]
    %43 = vrot.lane.b32.xlu0 %v42, 16
    %v44 = vpop.permute.xlu0 %43
    %vm45 = vcmask 261248
    %46 = vst.msk [vmem:[#allocation0] ss:$8 sm:$0xf] %vm45, %v44
    %s48 = sshll.u32 1, 1
    %s49 = ssub.s32 %s48, 1
    %v51 = vld [vmem:[#allocation0] sm:%s49]
    %s52 = sshll.u32 1, 1
    %s53 = ssub.s32 %s52, 1
    %54 = vst [vmem:[%s1] sm:%s53] %v51
    %s55 = scalar_lea.vmem [#allocation0], 8
    %v56 = vld [vmem:[%s55] sm:%s49]
    %s57 = sshll.u32 1, 1
    %s58 = ssub.s32 %s57, 1
    %s59 = scalar_lea.vmem %s1, 1
    %60 = vst [vmem:[%s59] sm:%s58] %v56
    %s61 = scalar_lea.vmem [#allocation0], 16
    %v62 = vld [vmem:[%s61] sm:%s49]
    %s63 = sshll.u32 1, 1
    %s64 = ssub.s32 %s63, 1
    %s65 = smul.addr 1, 2
    %s66 = scalar_lea.vmem %s1, %s65
    %67 = vst [vmem:[%s66] sm:%s64] %v62
    %s68 = scalar_lea.vmem [#allocation0], 24
    %v69 = vld [vmem:[%s68] sm:%s49]
    %s70 = sshll.u32 1, 1
    %s71 = ssub.s32 %s70, 1
    %s72 = smul.addr 1, 3
    %s73 = scalar_lea.vmem %s1, %s72
    %74 = vst [vmem:[%s73] sm:%s71] %v69

// kernel: squeeze.5
$region0: #{squeeze.5}
  %s0 = inlined_call_operand.vmem [shape: f32[2,4,16,16], index: 0, kind: input, shape index: {}]
  %s1 = inlined_call_operand.vmem [shape: f32[2,4,256], index: 1, kind: output, shape index: {}]
  $region1: #{squeeze.5} parent=0
    #allocation0 [shape = 'u8[16384]{0}', space=vmem, size = 0x4000, scoped, tag = 'scoped mem for output reshape']
    %v2 = vld [vmem:[%s0] ss:$8 sm:$0xf]
    %v3 = vld [vmem:[%s0] ss:$8 sm:$0xf0]
    %vm4 = vcmask 1047556
    %v5 = vsel %vm4, %v3, %v2
    %vm6 = vcmask 130048
    %7 = vst.msk [vmem:[#allocation0] ss:$8 sm:$0x3] %vm6, %v5
    %s8 = scalar_lea.vmem [#allocation0], 4294967281
    %9 = vst.msk [vmem:[%s8] ss:$8 sm:$0xc] %vm6, %v5
    %s10 = scalar_lea.vmem [#allocation0], 4294967266
    %11 = vst.msk [vmem:[%s10] ss:$8 sm:$0x30] %vm6, %v5
    %s12 = scalar_lea.vmem [#allocation0], 4294967251
    %13 = vst.msk [vmem:[%s12] ss:$8 sm:$0xc0] %vm6, %v5
    %s14 = scalar_lea.vmem %s0, 64
    %v15 = vld [vmem:[%s14] ss:$8 sm:$0xf]
    %s16 = scalar_lea.vmem %s0, 64
    %v17 = vld [vmem:[%s16] ss:$8 sm:$0xf0]
    %vm18 = vcmask 1047556
    %v19 = vsel %vm18, %v17, %v15
    %vm20 = vcmask 130048
    %s21 = scalar_lea.vmem [#allocation0], 16
    %22 = vst.msk [vmem:[%s21] ss:$8 sm:$0x3] %vm20, %v19
    %s23 = scalar_lea.vmem [#allocation0], 1
    %24 = vst.msk [vmem:[%s23] ss:$8 sm:$0xc] %vm20, %v19
    %s25 = scalar_lea.vmem [#allocation0], 4294967282
    %26 = vst.msk [vmem:[%s25] ss:$8 sm:$0x30] %vm20, %v19
    %s27 = scalar_lea.vmem [#allocation0], 4294967267
    %28 = vst.msk [vmem:[%s27] ss:$8 sm:$0xc0] %vm20, %v19
    %s29 = scalar_lea.vmem %s0, 7
    %s30 = smov 3
    %v31 = vld [vmem:[%s29] ss:$16 sm:%s30]
    %s32 = scalar_lea.vmem %s0, 7
    %s33 = smov 12
    %v34 = vld [vmem:[%s32] ss:$16 sm:%s33]
    %vm35 = vcmask 1043458
    %v36 = vsel %vm35, %v34, %v31
    %s37 = scalar_lea.vmem %s0, 4294967247
    %s38 = smov 48
    %v39 = vld [vmem:[%s37] ss:$16 sm:%s38]
    %vm40 = vcmask 1045508
    %v41 = vsel %vm40, %v39, %v36
    %s42 = scalar_lea.vmem %s0, 4294967247
    %s43 = smov 192
    %v44 = vld [vmem:[%s42] ss:$16 sm:%s43]
    %vm45 = vcmask 1047558
    %v46 = vsel %vm45, %v44, %v41
    %47 = vrot.lane.b32.xlu0 %v46, 112
    %v48 = vpop.permute.xlu0 %47
    %vm49 = vcmask 1048448
    %50 = vst.msk [vmem:[#allocation0] sm:$0xf] %vm49, %v48
    %s51 = scalar_lea.vmem [#allocation0], 4
    %52 = vst.msk [vmem:[%s51] sm:$0xf0] %vm49, %v48
    %s53 = scalar_lea.vmem %s0, 71
    %s54 = smov 3
    %v55 = vld [vmem:[%s53] ss:$16 sm:%s54]
    %s56 = scalar_lea.vmem %s0, 71
    %s57 = smov 12
    %v58 = vld [vmem:[%s56] ss:$16 sm:%s57]
    %vm59 = vcmask 1043458
    %v60 = vsel %vm59, %v58, %v55
    %s61 = scalar_lea.vmem %s0, 15
    %s62 = smov 48
    %v63 = vld [vmem:[%s61] ss:$16 sm:%s62]
    %vm64 = vcmask 1045508
    %v65 = vsel %vm64, %v63, %v60
    %s66 = scalar_lea.vmem %s0, 15
    %s67 = smov 192
    %v68 = vld [vmem:[%s66] ss:$16 sm:%s67]
    %vm69 = vcmask 1047558
    %v70 = vsel %vm69, %v68, %v65
    %71 = vrot.lane.b32.xlu0 %v70, 112
    %v72 = vpop.permute.xlu0 %71
    %vm73 = vcmask 1048448
    %s74 = scalar_lea.vmem [#allocation0], 16
    %75 = vst.msk [vmem:[%s74] sm:$0xf] %vm73, %v72
    %s76 = scalar_lea.vmem [#allocation0], 20
    %77 = vst.msk [vmem:[%s76] sm:$0xf0] %vm73, %v72
    %s78 = scalar_lea.vmem %s0, 6
    %s79 = smov 3
    %v80 = vld [vmem:[%s78] ss:$16 sm:%s79]
    %s81 = scalar_lea.vmem %s0, 6
    %s82 = smov 12
    %v83 = vld [vmem:[%s81] ss:$16 sm:%s82]
    %vm84 = vcmask 1043458
    %v85 = vsel %vm84, %v83, %v80
    %s86 = scalar_lea.vmem %s0, 4294967246
    %s87 = smov 48
    %v88 = vld [vmem:[%s86] ss:$16 sm:%s87]
    %vm89 = vcmask 1045508
    %v90 = vsel %vm89, %v88, %v85
    %s91 = scalar_lea.vmem %s0, 4294967246
    %s92 = smov 192
    %v93 = vld [vmem:[%s91] ss:$16 sm:%s92]
    %vm94 = vcmask 1047558
    %v95 = vsel %vm94, %v93, %v90
    %96 = vrot.lane.b32.xlu0 %v95, 96
    %v97 = vpop.permute.xlu0 %96
    %vm98 = vcmask 917248
    %99 = vst.msk [vmem:[#allocation0] sm:$0xf] %vm98, %v97
    %s100 = scalar_lea.vmem [#allocation0], 4
    %101 = vst.msk [vmem:[%s100] sm:$0xf0] %vm98, %v97
    %s102 = scalar_lea.vmem %s0, 70
    %s103 = smov 3
    %v104 = vld [vmem:[%s102] ss:$16 sm:%s103]
    %s105 = scalar_lea.vmem %s0, 70
    %s106 = smov 12
    %v107 = vld [vmem:[%s105] ss:$16 sm:%s106]
    %vm108 = vcmask 1043458
    %v109 = vsel %vm108, %v107, %v104
    %s110 = scalar_lea.vmem %s0, 14
    %s111 = smov 48
    %v112 = vld [vmem:[%s110] ss:$16 sm:%s111]
    %vm113 = vcmask 1045508
    %v114 = vsel %vm113, %v112, %v109
    %s115 = scalar_lea.vmem %s0, 14
    %s116 = smov 192
    %v117 = vld [vmem:[%s115] ss:$16 sm:%s116]
    %vm118 = vcmask 1047558
    %v119 = vsel %vm118, %v117, %v114
    %120 = vrot.lane.b32.xlu0 %v119, 96
    %v121 = vpop.permute.xlu0 %120
    %vm122 = vcmask 917248
    %s123 = scalar_lea.vmem [#allocation0], 16
    %124 = vst.msk [vmem:[%s123] sm:$0xf] %vm122, %v121
    %s125 = scalar_lea.vmem [#allocation0], 20
    %126 = vst.msk [vmem:[%s125] sm:$0xf0] %vm122, %v121
    %s127 = scalar_lea.vmem %s0, 5
    %s128 = smov 3
    %v129 = vld [vmem:[%s127] ss:$16 sm:%s128]
    %s130 = scalar_lea.vmem %s0, 5
    %s131 = smov 12
    %v132 = vld [vmem:[%s130] ss:$16 sm:%s131]
    %vm133 = vcmask 1043458
    %v134 = vsel %vm133, %v132, %v129
    %s135 = scalar_lea.vmem %s0, 4294967245
    %s136 = smov 48
    %v137 = vld [vmem:[%s135] ss:$16 sm:%s136]
    %vm138 = vcmask 1045508
    %v139 = vsel %vm138, %v137, %v134
    %s140 = scalar_lea.vmem %s0, 4294967245
    %s141 = smov 192
    %v142 = vld [vmem:[%s140] ss:$16 sm:%s141]
    %vm143 = vcmask 1047558
    %v144 = vsel %vm143, %v142, %v139
    %145 = vrot.lane.b32.xlu0 %v144, 80
    %v146 = vpop.permute.xlu0 %145
    %vm147 = vcmask 786048
    %148 = vst.msk [vmem:[#allocation0] sm:$0xf] %vm147, %v146
    %s149 = scalar_lea.vmem [#allocation0], 4
    %150 = vst.msk [vmem:[%s149] sm:$0xf0] %vm147, %v146
    %s151 = scalar_lea.vmem %s0, 69
    %s152 = smov 3
    %v153 = vld [vmem:[%s151] ss:$16 sm:%s152]
    %s154 = scalar_lea.vmem %s0, 69
    %s155 = smov 12
    %v156 = vld [vmem:[%s154] ss:$16 sm:%s155]
    %vm157 = vcmask 1043458
    %v158 = vsel %vm157, %v156, %v153
    %s159 = scalar_lea.vmem %s0, 13
    %s160 = smov 48
    %v161 = vld [vmem:[%s159] ss:$16 sm:%s160]
    %vm162 = vcmask 1045508
    %v163 = vsel %vm162, %v161, %v158
    %s164 = scalar_lea.vmem %s0, 13
    %s165 = smov 192
    %v166 = vld [vmem:[%s164] ss:$16 sm:%s165]
    %vm167 = vcmask 1047558
    %v168 = vsel %vm167, %v166, %v163
    %169 = vrot.lane.b32.xlu0 %v168, 80
    %v170 = vpop.permute.xlu0 %169
    %vm171 = vcmask 786048
    %s172 = scalar_lea.vmem [#allocation0], 16
    %173 = vst.msk [vmem:[%s172] sm:$0xf] %vm171, %v170
    %s174 = scalar_lea.vmem [#allocation0], 20
    %175 = vst.msk [vmem:[%s174] sm:$0xf0] %vm171, %v170
    %s176 = scalar_lea.vmem %s0, 4
    %s177 = smov 3
    %v178 = vld [vmem:[%s176] ss:$16 sm:%s177]
    %s179 = scalar_lea.vmem %s0, 4
    %s180 = smov 12
    %v181 = vld [vmem:[%s179] ss:$16 sm:%s180]
    %vm182 = vcmask 1043458
    %v183 = vsel %vm182, %v181, %v178
    %s184 = scalar_lea.vmem %s0, 4294967244
    %s185 = smov 48
    %v186 = vld [vmem:[%s184] ss:$16 sm:%s185]
    %vm187 = vcmask 1045508
    %v188 = vsel %vm187, %v186, %v183
    %s189 = scalar_lea.vmem %s0, 4294967244
    %s190 = smov 192
    %v191 = vld [vmem:[%s189] ss:$16 sm:%s190]
    %vm192 = vcmask 1047558
    %v193 = vsel %vm192, %v191, %v188
    %194 = vrot.lane.b32.xlu0 %v193, 64
    %v195 = vpop.permute.xlu0 %194
    %vm196 = vcmask 654848
    %197 = vst.msk [vmem:[#allocation0] sm:$0xf] %vm196, %v195
    %s198 = scalar_lea.vmem [#allocation0], 4
    %199 = vst.msk [vmem:[%s198] sm:$0xf0] %vm196, %v195
    %s200 = scalar_lea.vmem %s0, 68
    %s201 = smov 3
    %v202 = vld [vmem:[%s200] ss:$16 sm:%s201]
    %s203 = scalar_lea.vmem %s0, 68
    %s204 = smov 12
    %v205 = vld [vmem:[%s203] ss:$16 sm:%s204]
    %vm206 = vcmask 1043458
    %v207 = vsel %vm206, %v205, %v202
    %s208 = scalar_lea.vmem %s0, 12
    %s209 = smov 48
    %v210 = vld [vmem:[%s208] ss:$16 sm:%s209]
    %vm211 = vcmask 1045508
    %v212 = vsel %vm211, %v210, %v207
    %s213 = scalar_lea.vmem %s0, 12
    %s214 = smov 192
    %v215 = vld [vmem:[%s213] ss:$16 sm:%s214]
    %vm216 = vcmask 1047558
    %v217 = vsel %vm216, %v215, %v212
    %218 = vrot.lane.b32.xlu0 %v217, 64
    %v219 = vpop.permute.xlu0 %218
    %vm220 = vcmask 654848
    %s221 = scalar_lea.vmem [#allocation0], 16
    %222 = vst.msk [vmem:[%s221] sm:$0xf] %vm220, %v219
    %s223 = scalar_lea.vmem [#allocation0], 20
    %224 = vst.msk [vmem:[%s223] sm:$0xf0] %vm220, %v219
    %s225 = scalar_lea.vmem %s0, 3
    %s226 = smov 3
    %v227 = vld [vmem:[%s225] ss:$16 sm:%s226]
    %s228 = scalar_lea.vmem %s0, 3
    %s229 = smov 12
    %v230 = vld [vmem:[%s228] ss:$16 sm:%s229]
    %vm231 = vcmask 1043458
    %v232 = vsel %vm231, %v230, %v227
    %s233 = scalar_lea.vmem %s0, 4294967243
    %s234 = smov 48
    %v235 = vld [vmem:[%s233] ss:$16 sm:%s234]
    %vm236 = vcmask 1045508
    %v237 = vsel %vm236, %v235, %v232
    %s238 = scalar_lea.vmem %s0, 4294967243
    %s239 = smov 192
    %v240 = vld [vmem:[%s238] ss:$16 sm:%s239]
    %vm241 = vcmask 1047558
    %v242 = vsel %vm241, %v240, %v237
    %243 = vrot.lane.b32.xlu0 %v242, 48
    %v244 = vpop.permute.xlu0 %243
    %vm245 = vcmask 523648
    %246 = vst.msk [vmem:[#allocation0] sm:$0xf] %vm245, %v244
    %s247 = scalar_lea.vmem [#allocation0], 4
    %248 = vst.msk [vmem:[%s247] sm:$0xf0] %vm245, %v244
    %s249 = scalar_lea.vmem %s0, 67
    %s250 = smov 3
    %v251 = vld [vmem:[%s249] ss:$16 sm:%s250]
    %s252 = scalar_lea.vmem %s0, 67
    %s253 = smov 12
    %v254 = vld [vmem:[%s252] ss:$16 sm:%s253]
    %vm255 = vcmask 1043458
    %v256 = vsel %vm255, %v254, %v251
    %s257 = scalar_lea.vmem %s0, 11
    %s258 = smov 48
    %v259 = vld [vmem:[%s257] ss:$16 sm:%s258]
    %vm260 = vcmask 1045508
    %v261 = vsel %vm260, %v259, %v256
    %s262 = scalar_lea.vmem %s0, 11
    %s263 = smov 192
    %v264 = vld [vmem:[%s262] ss:$16 sm:%s263]
    %vm265 = vcmask 1047558
    %v266 = vsel %vm265, %v264, %v261
    %267 = vrot.lane.b32.xlu0 %v266, 48
    %v268 = vpop.permute.xlu0 %267
    %vm269 = vcmask 523648
    %s270 = scalar_lea.vmem [#allocation0], 16
    %271 = vst.msk [vmem:[%s270] sm:$0xf] %vm269, %v268
    %s272 = scalar_lea.vmem [#allocation0], 20
    %273 = vst.msk [vmem:[%s272] sm:$0xf0] %vm269, %v268
    %s274 = scalar_lea.vmem %s0, 2
    %s275 = smov 3
    %v276 = vld [vmem:[%s274] ss:$16 sm:%s275]
    %s277 = scalar_lea.vmem %s0, 2
    %s278 = smov 12
    %v279 = vld [vmem:[%s277] ss:$16 sm:%s278]
    %vm280 = vcmask 1043458
    %v281 = vsel %vm280, %v279, %v276
    %s282 = scalar_lea.vmem %s0, 4294967242
    %s283 = smov 48
    %v284 = vld [vmem:[%s282] ss:$16 sm:%s283]
    %vm285 = vcmask 1045508
    %v286 = vsel %vm285, %v284, %v281
    %s287 = scalar_lea.vmem %s0, 4294967242
    %s288 = smov 192
    %v289 = vld [vmem:[%s287] ss:$16 sm:%s288]
    %vm290 = vcmask 1047558
    %v291 = vsel %vm290, %v289, %v286
    %292 = vrot.lane.b32.xlu0 %v291, 32
    %v293 = vpop.permute.xlu0 %292
    %vm294 = vcmask 392448
    %295 = vst.msk [vmem:[#allocation0] sm:$0xf] %vm294, %v293
    %s296 = scalar_lea.vmem [#allocation0], 4
    %297 = vst.msk [vmem:[%s296] sm:$0xf0] %vm294, %v293
    %s298 = scalar_lea.vmem %s0, 66
    %s299 = smov 3
    %v300 = vld [vmem:[%s298] ss:$16 sm:%s299]
    %s301 = scalar_lea.vmem %s0, 66
    %s302 = smov 12
    %v303 = vld [vmem:[%s301] ss:$16 sm:%s302]
    %vm304 = vcmask 1043458
    %v305 = vsel %vm304, %v303, %v300
    %s306 = scalar_lea.vmem %s0, 10
    %s307 = smov 48
    %v308 = vld [vmem:[%s306] ss:$16 sm:%s307]
    %vm309 = vcmask 1045508
    %v310 = vsel %vm309, %v308, %v305
    %s311 = scalar_lea.vmem %s0, 10
    %s312 = smov 192
    %v313 = vld [vmem:[%s311] ss:$16 sm:%s312]
    %vm314 = vcmask 1047558
    %v315 = vsel %vm314, %v313, %v310
    %316 = vrot.lane.b32.xlu0 %v315, 32
    %v317 = vpop.permute.xlu0 %316
    %vm318 = vcmask 392448
    %s319 = scalar_lea.vmem [#allocation0], 16
    %320 = vst.msk [vmem:[%s319] sm:$0xf] %vm318, %v317
    %s321 = scalar_lea.vmem [#allocation0], 20
    %322 = vst.msk [vmem:[%s321] sm:$0xf0] %vm318, %v317
    %s323 = scalar_lea.vmem %s0, 1
    %s324 = smov 3
    %v325 = vld [vmem:[%s323] ss:$16 sm:%s324]
    %s326 = scalar_lea.vmem %s0, 1
    %s327 = smov 12
    %v328 = vld [vmem:[%s326] ss:$16 sm:%s327]
    %vm329 = vcmask 1043458
    %v330 = vsel %vm329, %v328, %v325
    %s331 = scalar_lea.vmem %s0, 4294967241
    %s332 = smov 48
    %v333 = vld [vmem:[%s331] ss:$16 sm:%s332]
    %vm334 = vcmask 1045508
    %v335 = vsel %vm334, %v333, %v330
    %s336 = scalar_lea.vmem %s0, 4294967241
    %s337 = smov 192
    %v338 = vld [vmem:[%s336] ss:$16 sm:%s337]
    %vm339 = vcmask 1047558
    %v340 = vsel %vm339, %v338, %v335
    %341 = vrot.lane.b32.xlu0 %v340, 16
    %v342 = vpop.permute.xlu0 %341
    %vm343 = vcmask 261248
    %344 = vst.msk [vmem:[#allocation0] sm:$0xf] %vm343, %v342
    %s345 = scalar_lea.vmem [#allocation0], 4
    %346 = vst.msk [vmem:[%s345] sm:$0xf0] %vm343, %v342
    %s347 = scalar_lea.vmem %s0, 65
    %s348 = smov 3
    %v349 = vld [vmem:[%s347] ss:$16 sm:%s348]
    %s350 = scalar_lea.vmem %s0, 65
    %s351 = smov 12
    %v352 = vld [vmem:[%s350] ss:$16 sm:%s351]
    %vm353 = vcmask 1043458
    %v354 = vsel %vm353, %v352, %v349
    %s355 = scalar_lea.vmem %s0, 9
    %s356 = smov 48
    %v357 = vld [vmem:[%s355] ss:$16 sm:%s356]
    %vm358 = vcmask 1045508
    %v359 = vsel %vm358, %v357, %v354
    %s360 = scalar_lea.vmem %s0, 9
    %s361 = smov 192
    %v362 = vld [vmem:[%s360] ss:$16 sm:%s361]
    %vm363 = vcmask 1047558
    %v364 = vsel %vm363, %v362, %v359
    %365 = vrot.lane.b32.xlu0 %v364, 16
    %v366 = vpop.permute.xlu0 %365
    %vm367 = vcmask 261248
    %s368 = scalar_lea.vmem [#allocation0], 16
    %369 = vst.msk [vmem:[%s368] sm:$0xf] %vm367, %v366
    %s370 = scalar_lea.vmem [#allocation0], 20
    %371 = vst.msk [vmem:[%s370] sm:$0xf0] %vm367, %v366
    %s373 = sshll.u32 1, 4
    %s374 = ssub.s32 %s373, 1
    %v376 = vld [vmem:[#allocation0] sm:%s374]
    %s377 = sshll.u32 1, 4
    %s378 = ssub.s32 %s377, 1
    %379 = vst [vmem:[%s1] sm:%s378] %v376
    %s380 = scalar_lea.vmem [#allocation0], 8
    %v381 = vld [vmem:[%s380] sm:%s374]
    %s382 = sshll.u32 1, 4
    %s383 = ssub.s32 %s382, 1
    %s384 = scalar_lea.vmem %s1, 4
    %385 = vst [vmem:[%s384] sm:%s383] %v381
    %s386 = scalar_lea.vmem [#allocation0], 16
    %v387 = vld [vmem:[%s386] sm:%s374]
    %s388 = sshll.u32 1, 4
    %s389 = ssub.s32 %s388, 1
    %s390 = smul.addr 4, 2
    %s391 = scalar_lea.vmem %s1, %s390
    %392 = vst [vmem:[%s391] sm:%s389] %v387
    %s393 = scalar_lea.vmem [#allocation0], 24
    %v394 = vld [vmem:[%s393] sm:%s374]
    %s395 = sshll.u32 1, 4
    %s396 = ssub.s32 %s395, 1
    %s397 = smul.addr 4, 3
    %s398 = scalar_lea.vmem %s1, %s397
    %399 = vst [vmem:[%s398] sm:%s396] %v394

// kernel: cmul_pallas.1
$region0: #{cmul_pallas.1}
  #allocation0 [shape = 'u32[]', space=smem, size = 0x4, offset = 0x4, fixed_abs, tag = 'smem constant byte address 0x4 - core index']
  #allocation1 [shape = 'u32[144,128]{1,0:T(1,128)}', space=vmem, size = 0x12000, scoped, tag = 'internal scratch']
  %s0 = inlined_call_operand.vmem [shape: f32[2,4,256], index: 0, kind: input, shape index: {}]
  %s1 = inlined_call_operand.vmem [shape: f32[2,4,256], index: 1, kind: input, shape index: {}]
  %s2 = inlined_call_operand.vmem [shape: f32[2,1,256], index: 2, kind: input, shape index: {}]
  %s3 = inlined_call_operand.vmem [shape: f32[2,1,256], index: 3, kind: input, shape index: {}]
  %s4 = inlined_call_operand.vmem [shape: f32[2,4,256], index: 4, kind: output, shape index: {0}]
  %s5 = inlined_call_operand.vmem [shape: f32[2,4,256], index: 5, kind: output, shape index: {1}]
  %6 = xla_tuple %s4, %s5
  %s7 = sld [smem:[#allocation0]]
  $region34: #{cmul_pallas.1} parent=0
    _
  %s9 = ssub.s32 1, %s7
  %s10 = scalar_select 0, %s9, %s7
  // Predicated region
  $region2: #{cmul_pallas.1} parent=0 // pred_check
    _
  $region3: #{cmul_pallas.1} parent=0 // pred_check_branch
    %12 = sbr.rel (0) target = $region5
  $region4: #{cmul_pallas.1} parent=0 // pred_region
    _
  $region5: #{cmul_pallas.1} parent=0 // pred_fallthru
    _
  // Predicated region
  $region6: #{cmul_pallas.1} parent=0 // pred_check
    _
  $region7: #{cmul_pallas.1} parent=0 // pred_check_branch
    %14 = sbr.rel (0) target = $region9
  $region8: #{cmul_pallas.1} parent=0 // pred_region
    _
  $region9: #{cmul_pallas.1} parent=0 // pred_fallthru
    _
  // Predicated region
  $region10: #{cmul_pallas.1} parent=0 // pred_check
    _
  $region11: #{cmul_pallas.1} parent=0 // pred_check_branch
    %16 = sbr.rel (0) target = $region13
  $region12: #{cmul_pallas.1} parent=0 // pred_region
    _
  $region13: #{cmul_pallas.1} parent=0 // pred_fallthru
    _
  // Predicated region
  $region14: #{cmul_pallas.1} parent=0 // pred_check
    _
  $region15: #{cmul_pallas.1} parent=0 // pred_check_branch
    %18 = sbr.rel (0) target = $region17
  $region16: #{cmul_pallas.1} parent=0 // pred_region
    _
  $region17: #{cmul_pallas.1} parent=0 // pred_fallthru
    _
  %v19 = vld [vmem:[%s0] sm:$0xff]
  %v20 = vld [vmem:[%s0 + $0x8] sm:$0xff]
  %v21 = vld [vmem:[%s1] sm:$0xff]
  %v22 = vld [vmem:[%s1 + $0x8] sm:$0xff]
  %v23 = vld [vmem:[%s2] sm:$0x3]
  %v24 = vld [vmem:[%s2 + $0x2] sm:$0x3]
  %v25 = vld [vmem:[%s3] sm:$0x3]
  %v26 = vld [vmem:[%s3 + $0x2] sm:$0x3]
  %v29 = vlaneseq
  %v30 = vshrl.u32 %v29, 7
  %v31 = vsub.s32 0, %v30
  %v32 = vrot.slane %v23, %v31
  %v33 = vlaneseq
  %v34 = vshrl.u32 %v33, 7
  %v35 = vsub.s32 1, %v34
  %v36 = vrot.slane %v23, %v35
  %v37 = vlaneseq
  %v38 = vshrl.u32 %v37, 7
  %v39 = vsub.s32 0, %v38
  %v40 = vrot.slane %v24, %v39
  %v41 = vlaneseq
  %v42 = vshrl.u32 %v41, 7
  %v43 = vsub.s32 1, %v42
  %v44 = vrot.slane %v24, %v43
  %v45 = vcombine.low %v32, %v36
  %v46 = vcombine.low %v40, %v44
  %v49 = vmul.f32 %v19, %v45
  %v50 = vmul.f32 %v20, %v46
  %v53 = vlaneseq
  %v54 = vshrl.u32 %v53, 7
  %v55 = vsub.s32 0, %v54
  %v56 = vrot.slane %v25, %v55
  %v57 = vlaneseq
  %v58 = vshrl.u32 %v57, 7
  %v59 = vsub.s32 1, %v58
  %v60 = vrot.slane %v25, %v59
  %v61 = vlaneseq
  %v62 = vshrl.u32 %v61, 7
  %v63 = vsub.s32 0, %v62
  %v64 = vrot.slane %v26, %v63
  %v65 = vlaneseq
  %v66 = vshrl.u32 %v65, 7
  %v67 = vsub.s32 1, %v66
  %v68 = vrot.slane %v26, %v67
  %v69 = vcombine.low %v56, %v60
  %v70 = vcombine.low %v64, %v68
  %v73 = vmul.f32 %v21, %v69
  %v74 = vmul.f32 %v22, %v70
  %v75 = vsub.f32 %v49, %v73
  %v76 = vsub.f32 %v50, %v74
  %77 = vst [vmem:[%s4] sm:$0xff] %v75
  %78 = vst [vmem:[%s4 + $0x8] sm:$0xff] %v76
  %v79 = vmul.f32 %v19, %v69
  %v80 = vmul.f32 %v20, %v70
  %v81 = vmul.f32 %v21, %v45
  %v82 = vmul.f32 %v22, %v46
  %v83 = vadd.f32 %v79, %v81
  %v84 = vadd.f32 %v80, %v82
  %85 = vst [vmem:[%s5] sm:$0xff] %v83
  %86 = vst [vmem:[%s5 + $0x8] sm:$0xff] %v84
  // Predicated region
  $region18: #{cmul_pallas.1} parent=0 // pred_check
    _
  $region19: #{cmul_pallas.1} parent=0 // pred_check_branch
    %88 = sbr.rel (0) target = $region21
  $region20: #{cmul_pallas.1} parent=0 // pred_region
    _
  $region21: #{cmul_pallas.1} parent=0 // pred_fallthru
    _
  // Predicated region
  $region22: #{cmul_pallas.1} parent=0 // pred_check
    _
  $region23: #{cmul_pallas.1} parent=0 // pred_check_branch
    %90 = sbr.rel (0) target = $region25
  $region24: #{cmul_pallas.1} parent=0 // pred_region
    _
  $region25: #{cmul_pallas.1} parent=0 // pred_fallthru
    _
  // Predicated region
  $region26: #{cmul_pallas.1} parent=0 // pred_check
    _
  $region27: #{cmul_pallas.1} parent=0 // pred_check_branch
    %92 = sbr.rel (0) target = $region29
  $region28: #{cmul_pallas.1} parent=0 // pred_region
    _
  $region29: #{cmul_pallas.1} parent=0 // pred_fallthru
    _
  // Predicated region
  $region30: #{cmul_pallas.1} parent=0 // pred_check
    _
  $region31: #{cmul_pallas.1} parent=0 // pred_check_branch
    %94 = sbr.rel (0) target = $region33
  $region32: #{cmul_pallas.1} parent=0 // pred_region
    _
  $region33: #{cmul_pallas.1} parent=0 // pred_fallthru
    _

</llo_original>
